<compile_context>
chip_gen: v5e
topology: v5e:2x2
jax: 0.10.0
libtpu: 0.0.40
codegen_flags: <defaults>
</compile_context>

<pallas_src>
import functools
import numpy as np
import jax
import jax.numpy as jnp
from jax.experimental import pallas as pl
from jax.experimental.pallas import tpu as pltpu


# ----------------------------- Pallas kernel ---------------------------------
def _softplus(x):
    # PyTorch nn.Softplus (beta=1, threshold=20)
    return jnp.where(x > 20.0, x, jnp.log1p(jnp.exp(jnp.minimum(x, 20.0))))


def _fused_conv_stack_kernel(x_ref, m_ref, *rest, num_layers, W, K, pad, cins, couts):
    """Fused multi-layer conv + Softplus + BN(eval) on one block of whole images.

    Activation layout: (channels, pixels), pixel axis (n-major, h, w) on lanes.
    Conv taps are formed from the VMEM-resident activation via pltpu.roll along
    the pixel axis + precomputed boundary masks (exactly reproduces zero padding
    and cross-image separation), concatenated once into an im2col patch with an
    extra all-ones row, and contracted on the MXU:
        (Cout, K*K*Cin + 1) @ (K*K*Cin + 1, PIX) -> (Cout, PIX)   (bias fused).
    """
    w_refs = rest[:num_layers]
    bn_ref = rest[num_layers]        # (Cmax, 2*(L-1)): [scale | shift] per hidden layer
    o_ref = rest[num_layers + 1]

    blk_pix = x_ref.shape[1]
    center = pad * K + pad           # tap with zero offset -> its mask row is all ones
    pd = m_ref.dtype                 # patch dtype (f32, or bf16 on v6e/v7x big blocks)

    msk = m_ref[...]                 # (K*K, blk_pix) precomputed boundary masks
    ones_row = msk[center:center + 1, :]   # all-ones row, doubles as the bias row
    bn = bn_ref[...]

    a = x_ref[...].astype(jnp.float32)     # (Cin0, blk_pix) resident activation
    for l in range(num_layers):
        cin, cout = cins[l], couts[l]
        a_pd = a.astype(pd)

        # ---- im2col: rolled + masked taps, concatenated once (no scratch) ----
        taps = []
        for t in range(K * K):
            dy, dx = t // K, t % K
            oy, ox = dy - pad, dx - pad
            sh = (-(oy * W + ox)) % blk_pix
            r = a_pd if sh == 0 else pltpu.roll(a_pd, shift=sh, axis=1)
            if t != center:
                r = r * msk[t:t + 1, :]
            taps.append(r)
        taps.append(ones_row)                        # bias row (weight has bias column)
        patch = jnp.concatenate(taps, axis=0)        # (K*K*cin + 1, blk_pix)

        # ---- conv (+ bias) as one MXU matmul, lane-dense along pixels --------
        z = jnp.dot(w_refs[l][...], patch,
                    preferred_element_type=jnp.float32)   # (cout, blk_pix) f32

        if l < num_layers - 1:
            z = _softplus(z)
            # eval-mode BatchNorm affine (per output channel)
            z = z * bn[0:cout, 2 * l:2 * l + 1] + bn[0:cout, 2 * l + 1:2 * l + 2]
            a = z                                         # stays in VMEM
        else:
            o_ref[...] = z.astype(o_ref.dtype)


def _chip_has_bf16_vpu():
    """True on bf16-native generations (v6e / v7x); False on v5e / unknown."""
    try:
        kind = jax.devices()[0].device_kind.lower()
    except Exception:
        return False
    return ("v6" in kind) or ("v7" in kind)


def fused_conv_stack(x_nchw, weights, biases, bn_scales, bn_shifts, padding):
    """Run the whole conv/Softplus/BN(eval) stack as one fused Pallas call.

    weights[l] is PyTorch layout (Cout_l, Cin_l, K, K); stride=1, zero padding.
    bn_scales / bn_shifts have length L-1 (the last layer gets conv+bias only).
    """
    N, C0, H, W = (int(s) for s in x_nchw.shape)
    L = len(weights)
    K = int(weights[0].shape[-1])
    cins = tuple(int(w.shape[1]) for w in weights)
    couts = tuple(int(w.shape[0]) for w in weights)
    assert cins[0] == C0
    cmax = max(max(cins), max(couts))
    hw = H * W

    # --- block-size policy: LARGEST images-per-block that fits the VMEM budget.
    # Footprint estimate (f32, per pixel): double-buffered in/out blocks + mask
    # block + resident activation + taps + concatenated patch + matmul result.
    bytes_per_px = 4 * (2 * C0 + 2 * couts[-1] + 2 * K * K
                        + 3 * cmax + 2 * (K * K * cmax + 1))
    budget = 12 * 1024 * 1024            # conservative; vmem_limit raised below
    divisors = [d for d in range(1, N + 1) if N % d == 0]
    nb = None
    for need_two_steps in (True, False):  # prefer >=2 grid steps (megacore on v7x)
        for d in sorted(divisors, reverse=True):
            blk = d * hw
            if blk % 128 != 0:
                continue                  # keep output stores lane-dense
            if blk * bytes_per_px > budget:
                continue
            if need_two_steps and N >= 2 and (N // d) < 2:
                continue
            nb = d
            break
        if nb is not None:
            break
    if nb is None:
        nb = N   # full-dim fallback: correct, but output stores become lane-masked
    blk_pix = nb * hw
    grid = (N // nb,)

    # bf16 patch only when the patch is large AND the chip is bf16-native; the
    # Softplus/BN epilogue and MXU accumulation stay f32 in all cases.
    pd = jnp.bfloat16 if (blk_pix >= 8192 and _chip_has_bf16_vpu()) else jnp.float32

    # Activation as (C, N*H*W), pixel order n-major / h / w (matches NCHW).
    x2d = x_nchw.transpose(1, 0, 2, 3).reshape(C0, N * hw).astype(jnp.float32)

    # Precomputed boundary masks: (K*K, blk_pix), periodic per image, so one
    # block (constant index_map -> fetched once) serves every grid step.
    p = np.arange(blk_pix)
    local = p % hw
    hh, ww = local // W, local % W
    mask_np = np.ones((K * K, blk_pix), np.float32)
    for t in range(K * K):
        dy, dx = t // K, t % K
        oy, ox = dy - padding, dx - padding
        valid = (hh + oy >= 0) & (hh + oy < H) & (ww + ox >= 0) & (ww + ox < W)
        mask_np[t] = valid.astype(np.float32)
    mask = jnp.asarray(mask_np).astype(pd)

    # Weights flattened tap-major (dy, dx, ci) to match the patch row order
    # row = (dy*K + dx)*Cin + ci, with the conv bias appended as a last column
    # (contracts against the patch's all-ones row -> bias fused into the MXU).
    w_mats = []
    for l, w in enumerate(weights):
        wf = w.astype(jnp.float32).transpose(0, 2, 3, 1).reshape(couts[l], K * K * cins[l])
        bcol = biases[l].astype(jnp.float32).reshape(couts[l], 1)
        w_mats.append(jnp.concatenate([wf, bcol], axis=1).astype(pd))

    # Tiny per-layer BN(eval) affine table: columns [2l, 2l+1] = scale, shift.
    if L > 1:
        cols = []
        for l in range(L - 1):
            s = jnp.zeros((cmax,), jnp.float32).at[:couts[l]].set(
                jnp.asarray(bn_scales[l], jnp.float32))
            t = jnp.zeros((cmax,), jnp.float32).at[:couts[l]].set(
                jnp.asarray(bn_shifts[l], jnp.float32))
            cols += [s, t]
        bn_tab = jnp.stack(cols, axis=1)                       # (cmax, 2*(L-1))
    else:
        bn_tab = jnp.zeros((cmax, 2), jnp.float32)

    kernel = functools.partial(_fused_conv_stack_kernel,
                               num_layers=L, W=W, K=K, pad=padding,
                               cins=cins, couts=couts)

    out2d = pl.pallas_call(
        kernel,
        out_shape=jax.ShapeDtypeStruct((couts[-1], N * hw), jnp.float32),
        grid_spec=pltpu.PrefetchScalarGridSpec(
            num_scalar_prefetch=0,
            grid=grid,
            in_specs=(
                [pl.BlockSpec((C0, blk_pix), lambda i: (0, i)),
                 pl.BlockSpec(mask.shape, lambda i: (0, 0))]
                + [pl.BlockSpec(wm.shape, lambda i: (0, 0)) for wm in w_mats]
                + [pl.BlockSpec(bn_tab.shape, lambda i: (0, 0))]
            ),
            out_specs=pl.BlockSpec((couts[-1], blk_pix), lambda i: (0, i)),
        ),
        compiler_params=pltpu.CompilerParams(
            dimension_semantics=("parallel",),
            # Raise the scoped VMEM limit (v5e default is 16 MiB); stays within
            # v7x's 64 MiB physical VMEM per TensorCore.
            vmem_limit_bytes=48 * 1024 * 1024,
        ),
    )(x2d, mask, *w_mats, bn_tab)

    return out2d.reshape(couts[-1], N, H, W).transpose(1, 0, 2, 3)   # back to NCHW


# ------------------- hypernetwork (plain JAX parameter glue) ------------------
# TODO(synk): NeurOpKrnTfm is referenced but not defined in free_net.py; we
# implement the standard transformer-encoder + linear-decoder hypernetwork it
# implies (d_model=2, nhead=2, post-LN, eval mode => dropout is identity).

def _layer_norm(x, g, b, eps=1e-5):
    mu = x.mean(-1, keepdims=True)
    var = ((x - mu) ** 2).mean(-1, keepdims=True)
    return (x - mu) / jnp.sqrt(var + eps) * g + b


def init_hypernet(key, d_model, nhead, nhid, nlayers, nout):
    ks = jax.random.split(key, nlayers * 6 + 2)

    def rnd(k, shape, scale=0.2):
        return scale * jax.random.normal(k, shape, jnp.float32)

    layers, idx = [], 0
    for _ in range(nlayers):
        layers.append(dict(
            wq=rnd(ks[idx + 0], (d_model, d_model)), bq=jnp.zeros((d_model,)),
            wk=rnd(ks[idx + 1], (d_model, d_model)), bk=jnp.zeros((d_model,)),
            wv=rnd(ks[idx + 2], (d_model, d_model)), bv=jnp.zeros((d_model,)),
            wo=rnd(ks[idx + 3], (d_model, d_model)), bo=jnp.zeros((d_model,)),
            w1=rnd(ks[idx + 4], (d_model, nhid)),    b1=jnp.zeros((nhid,)),
            w2=rnd(ks[idx + 5], (nhid, d_model)),    b2=jnp.zeros((d_model,)),
            ln1_g=jnp.ones((d_model,)), ln1_b=jnp.zeros((d_model,)),
            ln2_g=jnp.ones((d_model,)), ln2_b=jnp.zeros((d_model,)),
        ))
        idx += 6
    dec_w = rnd(ks[-2], (d_model, nout))
    dec_b = rnd(ks[-1], (nout,), scale=0.05)
    return dict(layers=layers, dec_w=dec_w, dec_b=dec_b, nhead=nhead, d_model=d_model)


def hypernet_forward(params, coords):     # coords: (S, 1, 2)  (seq, batch, feat)
    S, _, d = coords.shape
    nhead = params["nhead"]
    hd = d // nhead
    x = coords[:, 0, :]
    pos = jnp.arange(S, dtype=jnp.float32)[:, None]
    pe = jnp.concatenate([jnp.sin(pos), jnp.cos(pos)], axis=1)   # sinusoidal PE, d=2
    x = x * jnp.sqrt(jnp.float32(d)) + pe
    for L in params["layers"]:
        q = x @ L["wq"] + L["bq"]
        k = x @ L["wk"] + L["bk"]
        v = x @ L["wv"] + L["bv"]
        qh = q.reshape(S, nhead, hd).transpose(1, 0, 2)
        kh = k.reshape(S, nhead, hd).transpose(1, 0, 2)
        vh = v.reshape(S, nhead, hd).transpose(1, 0, 2)
        att = jax.nn.softmax(qh @ kh.transpose(0, 2, 1) / jnp.sqrt(jnp.float32(hd)), axis=-1)
        ctx = (att @ vh).transpose(1, 0, 2).reshape(S, d)
        x = _layer_norm(x + (ctx @ L["wo"] + L["bo"]), L["ln1_g"], L["ln1_b"])
        ff = jax.nn.relu(x @ L["w1"] + L["b1"]) @ L["w2"] + L["b2"]
        x = _layer_norm(x + ff, L["ln2_g"], L["ln2_b"])
    out = x @ params["dec_w"] + params["dec_b"]                   # (S, nout)
    return out[:, None, :]                                        # (S, 1, nout)


# ------------------------------ full module -----------------------------------
class NeuropCNNTransformerPallas:
    def __init__(self, key, kernel_shapes, c_in=1, c_hidden=8, c_out=-1,
                 default_shape=(2, 1, 16, 16), nhid=64, nlayers=2):
        self.default_x = default_shape[-1]
        self.default_c = c_in
        self.default_ks = kernel_shapes
        c_out = c_out if c_out > 0 else 2 * c_in
        self.c_out, self.c_hidden = c_out, c_hidden
        self.channel_schedule = [c_hidden] * (len(kernel_shapes) - 1) + [c_out]
        nout = (len(kernel_shapes) - 2) * c_hidden ** 2 + c_hidden * c_in + c_hidden * c_out
        self.hyper = init_hypernet(key, d_model=2, nhead=2, nhid=nhid,
                                   nlayers=nlayers, nout=nout)
        # conv biases (PyTorch init: zeros) + eval-mode BatchNorm running stats
        self.bias = [jnp.zeros((c_hidden,), jnp.float32) for _ in range(len(kernel_shapes) - 1)] \
                    + [jnp.zeros((c_out,), jnp.float32)]
        eps = 1e-5
        gamma = jnp.ones((c_hidden,), jnp.float32)
        beta = jnp.zeros((c_hidden,), jnp.float32)
        rmean = jnp.zeros((c_hidden,), jnp.float32)
        rvar = jnp.ones((c_hidden,), jnp.float32)
        self.bn_scale = gamma / jnp.sqrt(rvar + eps)
        self.bn_shift = beta - rmean * self.bn_scale

    def _get_params(self, shape):
        ratio = shape[-1] / self.default_x
        ks0 = self.default_ks[0]
        k = round(ratio * ks0)
        k = k if k % 2 != 0 else k + 1
        padding = (k - 1) // 2
        t = jnp.array([1.0 / (2 * k) + j / k for j in range(k)], jnp.float32)
        X, Y = jnp.meshgrid(t, t, indexing="xy")
        idc = jnp.stack([X, Y], axis=2).reshape(-1, 2)
        return idc, padding, k

    def _generate_weights(self, x_shape):
        idc, padding, k = self._get_params(x_shape)
        coords = idc[:, None, :]                                       # (k*k, 1, 2)
        kernels = jnp.transpose(hypernet_forward(self.hyper, coords), (2, 1, 0))  # (nout,1,k*k)
        weights, prev, cc = [], self.default_c, 0
        for o in self.channel_schedule:
            num = prev * o
            weights.append(kernels[cc:cc + num].reshape(o, prev, k, k))  # (Cout,Cin,K,K)
            cc += num
            prev = o
        return weights, padding, k

    def __call__(self, x):
        weights, padding, _ = self._generate_weights(x.shape)
        L = len(weights)
        bn_scales = [self.bn_scale for _ in range(L - 1)]
        bn_shifts = [self.bn_shift for _ in range(L - 1)]
        # residual=None, linear=False (module defaults) -> no extra branches
        return fused_conv_stack(x, weights, self.bias, bn_scales, bn_shifts, padding)


# -------------------------- pure-XLA reference check ---------------------------
def reference_forward(model, x):
    weights, padding, _ = model._generate_weights(x.shape)
    for i, w in enumerate(weights):
        x = jax.lax.conv_general_dilated(
            x, w, (1, 1), [(padding, padding)] * 2,
            dimension_numbers=("NCHW", "OIHW", "NCHW"))
        x = x + model.bias[i][None, :, None, None]
        if i < len(model.channel_schedule) - 1:
            x = _softplus(x)
            x = x * model.bn_scale[None, :, None, None] + model.bn_shift[None, :, None, None]
    return x


if __name__ == "__main__":
    key = jax.random.PRNGKey(0)
    kparam, kx = jax.random.split(key)

    kernel_shapes = [3, 3, 3]          # 3 hypernetwork-generated conv layers
    model = NeuropCNNTransformerPallas(kparam, kernel_shapes, c_in=1, c_hidden=8,
                                       default_shape=(2, 1, 16, 16))

    x = jax.random.normal(kx, (2, 1, 16, 16), jnp.float32)   # NCHW, like PyTorch
    fwd = jax.jit(lambda inp: model(inp))
    y = jax.block_until_ready(fwd(x))
    assert y.shape == (2, 2, 16, 16), y.shape

    y_ref = jax.block_until_ready(reference_forward(model, x))
    assert np.allclose(np.asarray(y), np.asarray(y_ref), atol=2e-3, rtol=2e-3)

    print("KERNEL_OK")
</pallas_src>

<mosaic_0001>
module attributes {stable_mosaic.version = 11 : i64} {
  func.func @_fused_conv_stack_kernel(%arg0: i32, %arg1: memref<1x256xf32, #tpu.memory_space<vmem>>, %arg2: memref<9x256xf32, #tpu.memory_space<vmem>>, %arg3: memref<8x10xf32, #tpu.memory_space<vmem>>, %arg4: memref<8x73xf32, #tpu.memory_space<vmem>>, %arg5: memref<2x73xf32, #tpu.memory_space<vmem>>, %arg6: memref<8x4xf32, #tpu.memory_space<vmem>>, %arg7: memref<2x256xf32, #tpu.memory_space<vmem>>) attributes {dimension_semantics = [#tpu.dimension_semantics<parallel>], iteration_bounds = array<i64: 2>, scalar_prefetch = 0 : i64, scratch_operands = 0 : i64, tpu.core_type = #tpu.core_type<tc>, window_params = [{transform_indices = @transform_0, window_bounds = array<i64: 1, 256>}, {pipeline_mode = #tpu.pipeline_mode<synchronous>, transform_indices = @transform_1, window_bounds = array<i64: 9, 256>}, {pipeline_mode = #tpu.pipeline_mode<synchronous>, transform_indices = @transform_2, window_bounds = array<i64: 8, 10>}, {pipeline_mode = #tpu.pipeline_mode<synchronous>, transform_indices = @transform_3, window_bounds = array<i64: 8, 73>}, {pipeline_mode = #tpu.pipeline_mode<synchronous>, transform_indices = @transform_4, window_bounds = array<i64: 2, 73>}, {pipeline_mode = #tpu.pipeline_mode<synchronous>, transform_indices = @transform_5, window_bounds = array<i64: 8, 4>}, {transform_indices = @transform_6, window_bounds = array<i64: 2, 256>}]} {
    %c0 = arith.constant 0 : index
    %c0_0 = arith.constant 0 : index
    %0 = vector.load %arg2[%c0, %c0_0] : memref<9x256xf32, #tpu.memory_space<vmem>>, vector<9x256xf32>
    %1 = vector.extract_strided_slice %0 {offsets = [4, 0], sizes = [1, 256], strides = [1, 1]} : vector<9x256xf32> to vector<1x256xf32>
    %c0_1 = arith.constant 0 : index
    %c0_2 = arith.constant 0 : index
    %2 = vector.load %arg6[%c0_1, %c0_2] : memref<8x4xf32, #tpu.memory_space<vmem>>, vector<8x4xf32>
    %c0_3 = arith.constant 0 : index
    %c0_4 = arith.constant 0 : index
    %3 = vector.load %arg1[%c0_3, %c0_4] : memref<1x256xf32, #tpu.memory_space<vmem>>, vector<1x256xf32>
    %c17_i32 = arith.constant 17 : i32
    %4 = tpu.dynamic_rotate %3 by %c17_i32 dim 1 : vector<1x256xf32>, i32 -> vector<1x256xf32>
    %5 = vector.extract_strided_slice %0 {offsets = [0, 0], sizes = [1, 256], strides = [1, 1]} : vector<9x256xf32> to vector<1x256xf32>
    %6 = arith.mulf %4, %5 : vector<1x256xf32>
    %c16_i32 = arith.constant 16 : i32
    %7 = tpu.dynamic_rotate %3 by %c16_i32 dim 1 : vector<1x256xf32>, i32 -> vector<1x256xf32>
    %8 = vector.extract_strided_slice %0 {offsets = [1, 0], sizes = [1, 256], strides = [1, 1]} : vector<9x256xf32> to vector<1x256xf32>
    %9 = arith.mulf %7, %8 : vector<1x256xf32>
    %c15_i32 = arith.constant 15 : i32
    %10 = tpu.dynamic_rotate %3 by %c15_i32 dim 1 : vector<1x256xf32>, i32 -> vector<1x256xf32>
    %11 = vector.extract_strided_slice %0 {offsets = [2, 0], sizes = [1, 256], strides = [1, 1]} : vector<9x256xf32> to vector<1x256xf32>
    %12 = arith.mulf %10, %11 : vector<1x256xf32>
    %c1_i32 = arith.constant 1 : i32
    %13 = tpu.dynamic_rotate %3 by %c1_i32 dim 1 : vector<1x256xf32>, i32 -> vector<1x256xf32>
    %14 = vector.extract_strided_slice %0 {offsets = [3, 0], sizes = [1, 256], strides = [1, 1]} : vector<9x256xf32> to vector<1x256xf32>
    %15 = arith.mulf %13, %14 : vector<1x256xf32>
    %c255_i32 = arith.constant 255 : i32
    %16 = tpu.dynamic_rotate %3 by %c255_i32 dim 1 : vector<1x256xf32>, i32 -> vector<1x256xf32>
    %17 = vector.extract_strided_slice %0 {offsets = [5, 0], sizes = [1, 256], strides = [1, 1]} : vector<9x256xf32> to vector<1x256xf32>
    %18 = arith.mulf %16, %17 : vector<1x256xf32>
    %c241_i32 = arith.constant 241 : i32
    %19 = tpu.dynamic_rotate %3 by %c241_i32 dim 1 : vector<1x256xf32>, i32 -> vector<1x256xf32>
    %20 = vector.extract_strided_slice %0 {offsets = [6, 0], sizes = [1, 256], strides = [1, 1]} : vector<9x256xf32> to vector<1x256xf32>
    %21 = arith.mulf %19, %20 : vector<1x256xf32>
    %c240_i32 = arith.constant 240 : i32
    %22 = tpu.dynamic_rotate %3 by %c240_i32 dim 1 : vector<1x256xf32>, i32 -> vector<1x256xf32>
    %23 = vector.extract_strided_slice %0 {offsets = [7, 0], sizes = [1, 256], strides = [1, 1]} : vector<9x256xf32> to vector<1x256xf32>
    %24 = arith.mulf %22, %23 : vector<1x256xf32>
    %c239_i32 = arith.constant 239 : i32
    %25 = tpu.dynamic_rotate %3 by %c239_i32 dim 1 : vector<1x256xf32>, i32 -> vector<1x256xf32>
    %26 = vector.extract_strided_slice %0 {offsets = [8, 0], sizes = [1, 256], strides = [1, 1]} : vector<9x256xf32> to vector<1x256xf32>
    %27 = arith.mulf %25, %26 : vector<1x256xf32>
    %28 = tpu.concatenate %6, %9, %12, %15, %3, %18, %21, %24, %27, %1 in 0 : vector<1x256xf32>, vector<1x256xf32>, vector<1x256xf32>, vector<1x256xf32>, vector<1x256xf32>, vector<1x256xf32>, vector<1x256xf32>, vector<1x256xf32>, vector<1x256xf32>, vector<1x256xf32> -> vector<10x256xf32>
    %c0_5 = arith.constant 0 : index
    %c0_6 = arith.constant 0 : index
    %29 = vector.load %arg3[%c0_5, %c0_6] : memref<8x10xf32, #tpu.memory_space<vmem>>, vector<8x10xf32>
    %cst = arith.constant dense<0.000000e+00> : vector<8x256xf32>
    %30 = tpu.matmul %29, %28, %cst {dimension_numbers = #tpu.dot_dimension_numbers<[1], [0], [0], [1], [0, 0, 1, 1], [], []>} : vector<8x10xf32>, vector<10x256xf32>, vector<8x256xf32> -> vector<8x256xf32>
    %cst_7 = arith.constant 2.000000e+01 : f32
    %31 = vector.broadcast %cst_7 : f32 to vector<8x256xf32>
    %32 = arith.cmpf ogt, %30, %31 : vector<8x256xf32>
    %cst_8 = arith.constant 2.000000e+01 : f32
    %33 = vector.broadcast %cst_8 : f32 to vector<8x256xf32>
    %34 = arith.minimumf %30, %33 : vector<8x256xf32>
    %35 = math.exp %34 : vector<8x256xf32>
    %36 = math.log1p %35 : vector<8x256xf32>
    %37 = arith.select %32, %30, %36 : vector<8x256xi1>, vector<8x256xf32>
    %38 = vector.extract_strided_slice %2 {offsets = [0, 0], sizes = [8, 1], strides = [1, 1]} : vector<8x4xf32> to vector<8x1xf32>
    %39 = vector.broadcast %38 : vector<8x1xf32> to vector<8x256xf32>
    %40 = arith.mulf %37, %39 : vector<8x256xf32>
    %41 = vector.extract_strided_slice %2 {offsets = [0, 1], sizes = [8, 1], strides = [1, 1]} : vector<8x4xf32> to vector<8x1xf32>
    %42 = vector.broadcast %41 : vector<8x1xf32> to vector<8x256xf32>
    %43 = arith.addf %40, %42 : vector<8x256xf32>
    %c17_i32_9 = arith.constant 17 : i32
    %44 = tpu.dynamic_rotate %43 by %c17_i32_9 dim 1 : vector<8x256xf32>, i32 -> vector<8x256xf32>
    %45 = vector.extract_strided_slice %0 {offsets = [0, 0], sizes = [1, 256], strides = [1, 1]} : vector<9x256xf32> to vector<1x256xf32>
    %46 = vector.broadcast %45 : vector<1x256xf32> to vector<8x256xf32>
    %47 = arith.mulf %44, %46 : vector<8x256xf32>
    %c16_i32_10 = arith.constant 16 : i32
    %48 = tpu.dynamic_rotate %43 by %c16_i32_10 dim 1 : vector<8x256xf32>, i32 -> vector<8x256xf32>
    %49 = vector.extract_strided_slice %0 {offsets = [1, 0], sizes = [1, 256], strides = [1, 1]} : vector<9x256xf32> to vector<1x256xf32>
    %50 = vector.broadcast %49 : vector<1x256xf32> to vector<8x256xf32>
    %51 = arith.mulf %48, %50 : vector<8x256xf32>
    %c15_i32_11 = arith.constant 15 : i32
    %52 = tpu.dynamic_rotate %43 by %c15_i32_11 dim 1 : vector<8x256xf32>, i32 -> vector<8x256xf32>
    %53 = vector.extract_strided_slice %0 {offsets = [2, 0], sizes = [1, 256], strides = [1, 1]} : vector<9x256xf32> to vector<1x256xf32>
    %54 = vector.broadcast %53 : vector<1x256xf32> to vector<8x256xf32>
    %55 = arith.mulf %52, %54 : vector<8x256xf32>
    %c1_i32_12 = arith.constant 1 : i32
    %56 = tpu.dynamic_rotate %43 by %c1_i32_12 dim 1 : vector<8x256xf32>, i32 -> vector<8x256xf32>
    %57 = vector.extract_strided_slice %0 {offsets = [3, 0], sizes = [1, 256], strides = [1, 1]} : vector<9x256xf32> to vector<1x256xf32>
    %58 = vector.broadcast %57 : vector<1x256xf32> to vector<8x256xf32>
    %59 = arith.mulf %56, %58 : vector<8x256xf32>
    %c255_i32_13 = arith.constant 255 : i32
    %60 = tpu.dynamic_rotate %43 by %c255_i32_13 dim 1 : vector<8x256xf32>, i32 -> vector<8x256xf32>
    %61 = vector.extract_strided_slice %0 {offsets = [5, 0], sizes = [1, 256], strides = [1, 1]} : vector<9x256xf32> to vector<1x256xf32>
    %62 = vector.broadcast %61 : vector<1x256xf32> to vector<8x256xf32>
    %63 = arith.mulf %60, %62 : vector<8x256xf32>
    %c241_i32_14 = arith.constant 241 : i32
    %64 = tpu.dynamic_rotate %43 by %c241_i32_14 dim 1 : vector<8x256xf32>, i32 -> vector<8x256xf32>
    %65 = vector.extract_strided_slice %0 {offsets = [6, 0], sizes = [1, 256], strides = [1, 1]} : vector<9x256xf32> to vector<1x256xf32>
    %66 = vector.broadcast %65 : vector<1x256xf32> to vector<8x256xf32>
    %67 = arith.mulf %64, %66 : vector<8x256xf32>
    %c240_i32_15 = arith.constant 240 : i32
    %68 = tpu.dynamic_rotate %43 by %c240_i32_15 dim 1 : vector<8x256xf32>, i32 -> vector<8x256xf32>
    %69 = vector.extract_strided_slice %0 {offsets = [7, 0], sizes = [1, 256], strides = [1, 1]} : vector<9x256xf32> to vector<1x256xf32>
    %70 = vector.broadcast %69 : vector<1x256xf32> to vector<8x256xf32>
    %71 = arith.mulf %68, %70 : vector<8x256xf32>
    %c239_i32_16 = arith.constant 239 : i32
    %72 = tpu.dynamic_rotate %43 by %c239_i32_16 dim 1 : vector<8x256xf32>, i32 -> vector<8x256xf32>
    %73 = vector.extract_strided_slice %0 {offsets = [8, 0], sizes = [1, 256], strides = [1, 1]} : vector<9x256xf32> to vector<1x256xf32>
    %74 = vector.broadcast %73 : vector<1x256xf32> to vector<8x256xf32>
    %75 = arith.mulf %72, %74 : vector<8x256xf32>
    %76 = tpu.concatenate %47, %51, %55, %59, %43, %63, %67, %71, %75, %1 in 0 : vector<8x256xf32>, vector<8x256xf32>, vector<8x256xf32>, vector<8x256xf32>, vector<8x256xf32>, vector<8x256xf32>, vector<8x256xf32>, vector<8x256xf32>, vector<8x256xf32>, vector<1x256xf32> -> vector<73x256xf32>
    %c0_17 = arith.constant 0 : index
    %c0_18 = arith.constant 0 : index
    %77 = vector.load %arg4[%c0_17, %c0_18] : memref<8x73xf32, #tpu.memory_space<vmem>>, vector<8x73xf32>
    %cst_19 = arith.constant dense<0.000000e+00> : vector<8x256xf32>
    %78 = tpu.matmul %77, %76, %cst_19 {dimension_numbers = #tpu.dot_dimension_numbers<[1], [0], [0], [1], [0, 0, 1, 1], [], []>} : vector<8x73xf32>, vector<73x256xf32>, vector<8x256xf32> -> vector<8x256xf32>
    %cst_20 = arith.constant 2.000000e+01 : f32
    %79 = vector.broadcast %cst_20 : f32 to vector<8x256xf32>
    %80 = arith.cmpf ogt, %78, %79 : vector<8x256xf32>
    %cst_21 = arith.constant 2.000000e+01 : f32
    %81 = vector.broadcast %cst_21 : f32 to vector<8x256xf32>
    %82 = arith.minimumf %78, %81 : vector<8x256xf32>
    %83 = math.exp %82 : vector<8x256xf32>
    %84 = math.log1p %83 : vector<8x256xf32>
    %85 = arith.select %80, %78, %84 : vector<8x256xi1>, vector<8x256xf32>
    %86 = vector.extract_strided_slice %2 {offsets = [0, 2], sizes = [8, 1], strides = [1, 1]} : vector<8x4xf32> to vector<8x1xf32>
    %87 = vector.broadcast %86 : vector<8x1xf32> to vector<8x256xf32>
    %88 = arith.mulf %85, %87 : vector<8x256xf32>
    %89 = vector.extract_strided_slice %2 {offsets = [0, 3], sizes = [8, 1], strides = [1, 1]} : vector<8x4xf32> to vector<8x1xf32>
    %90 = vector.broadcast %89 : vector<8x1xf32> to vector<8x256xf32>
    %91 = arith.addf %88, %90 : vector<8x256xf32>
    %c17_i32_22 = arith.constant 17 : i32
    %92 = tpu.dynamic_rotate %91 by %c17_i32_22 dim 1 : vector<8x256xf32>, i32 -> vector<8x256xf32>
    %93 = vector.extract_strided_slice %0 {offsets = [0, 0], sizes = [1, 256], strides = [1, 1]} : vector<9x256xf32> to vector<1x256xf32>
    %94 = vector.broadcast %93 : vector<1x256xf32> to vector<8x256xf32>
    %95 = arith.mulf %92, %94 : vector<8x256xf32>
    %c16_i32_23 = arith.constant 16 : i32
    %96 = tpu.dynamic_rotate %91 by %c16_i32_23 dim 1 : vector<8x256xf32>, i32 -> vector<8x256xf32>
    %97 = vector.extract_strided_slice %0 {offsets = [1, 0], sizes = [1, 256], strides = [1, 1]} : vector<9x256xf32> to vector<1x256xf32>
    %98 = vector.broadcast %97 : vector<1x256xf32> to vector<8x256xf32>
    %99 = arith.mulf %96, %98 : vector<8x256xf32>
    %c15_i32_24 = arith.constant 15 : i32
    %100 = tpu.dynamic_rotate %91 by %c15_i32_24 dim 1 : vector<8x256xf32>, i32 -> vector<8x256xf32>
    %101 = vector.extract_strided_slice %0 {offsets = [2, 0], sizes = [1, 256], strides = [1, 1]} : vector<9x256xf32> to vector<1x256xf32>
    %102 = vector.broadcast %101 : vector<1x256xf32> to vector<8x256xf32>
    %103 = arith.mulf %100, %102 : vector<8x256xf32>
    %c1_i32_25 = arith.constant 1 : i32
    %104 = tpu.dynamic_rotate %91 by %c1_i32_25 dim 1 : vector<8x256xf32>, i32 -> vector<8x256xf32>
    %105 = vector.extract_strided_slice %0 {offsets = [3, 0], sizes = [1, 256], strides = [1, 1]} : vector<9x256xf32> to vector<1x256xf32>
    %106 = vector.broadcast %105 : vector<1x256xf32> to vector<8x256xf32>
    %107 = arith.mulf %104, %106 : vector<8x256xf32>
    %c255_i32_26 = arith.constant 255 : i32
    %108 = tpu.dynamic_rotate %91 by %c255_i32_26 dim 1 : vector<8x256xf32>, i32 -> vector<8x256xf32>
    %109 = vector.extract_strided_slice %0 {offsets = [5, 0], sizes = [1, 256], strides = [1, 1]} : vector<9x256xf32> to vector<1x256xf32>
    %110 = vector.broadcast %109 : vector<1x256xf32> to vector<8x256xf32>
    %111 = arith.mulf %108, %110 : vector<8x256xf32>
    %c241_i32_27 = arith.constant 241 : i32
    %112 = tpu.dynamic_rotate %91 by %c241_i32_27 dim 1 : vector<8x256xf32>, i32 -> vector<8x256xf32>
    %113 = vector.extract_strided_slice %0 {offsets = [6, 0], sizes = [1, 256], strides = [1, 1]} : vector<9x256xf32> to vector<1x256xf32>
    %114 = vector.broadcast %113 : vector<1x256xf32> to vector<8x256xf32>
    %115 = arith.mulf %112, %114 : vector<8x256xf32>
    %c240_i32_28 = arith.constant 240 : i32
    %116 = tpu.dynamic_rotate %91 by %c240_i32_28 dim 1 : vector<8x256xf32>, i32 -> vector<8x256xf32>
    %117 = vector.extract_strided_slice %0 {offsets = [7, 0], sizes = [1, 256], strides = [1, 1]} : vector<9x256xf32> to vector<1x256xf32>
    %118 = vector.broadcast %117 : vector<1x256xf32> to vector<8x256xf32>
    %119 = arith.mulf %116, %118 : vector<8x256xf32>
    %c239_i32_29 = arith.constant 239 : i32
    %120 = tpu.dynamic_rotate %91 by %c239_i32_29 dim 1 : vector<8x256xf32>, i32 -> vector<8x256xf32>
    %121 = vector.extract_strided_slice %0 {offsets = [8, 0], sizes = [1, 256], strides = [1, 1]} : vector<9x256xf32> to vector<1x256xf32>
    %122 = vector.broadcast %121 : vector<1x256xf32> to vector<8x256xf32>
    %123 = arith.mulf %120, %122 : vector<8x256xf32>
    %124 = tpu.concatenate %95, %99, %103, %107, %91, %111, %115, %119, %123, %1 in 0 : vector<8x256xf32>, vector<8x256xf32>, vector<8x256xf32>, vector<8x256xf32>, vector<8x256xf32>, vector<8x256xf32>, vector<8x256xf32>, vector<8x256xf32>, vector<8x256xf32>, vector<1x256xf32> -> vector<73x256xf32>
    %c0_30 = arith.constant 0 : index
    %c0_31 = arith.constant 0 : index
    %125 = vector.load %arg5[%c0_30, %c0_31] : memref<2x73xf32, #tpu.memory_space<vmem>>, vector<2x73xf32>
    %cst_32 = arith.constant dense<0.000000e+00> : vector<2x256xf32>
    %126 = tpu.matmul %125, %124, %cst_32 {dimension_numbers = #tpu.dot_dimension_numbers<[1], [0], [0], [1], [0, 0, 1, 1], [], []>} : vector<2x73xf32>, vector<73x256xf32>, vector<2x256xf32> -> vector<2x256xf32>
    %c0_33 = arith.constant 0 : index
    %c0_34 = arith.constant 0 : index
    %127 = vector.load %arg7[%c0_33, %c0_34] : memref<2x256xf32, #tpu.memory_space<vmem>>, vector<2x256xf32>
    tpu.vector_store %arg7[%c0_33, %c0_34], %126 {strides = array<i32>} : memref<2x256xf32, #tpu.memory_space<vmem>>, vector<2x256xf32>,
    return
  }
  func.func @transform_0(%arg0: i32) -> (i32, i32) {
    %c0_i32 = arith.constant 0 : i32
    %c0_i32_0 = arith.constant 0 : i32
    return %c0_i32, %arg0 : i32, i32
  }
  func.func @transform_1(%arg0: i32) -> (i32, i32) {
    %c0_i32 = arith.constant 0 : i32
    %c0_i32_0 = arith.constant 0 : i32
    %c0_i32_1 = arith.constant 0 : i32
    return %c0_i32, %c0_i32_0 : i32, i32
  }
  func.func @transform_2(%arg0: i32) -> (i32, i32) {
    %c0_i32 = arith.constant 0 : i32
    %c0_i32_0 = arith.constant 0 : i32
    %c0_i32_1 = arith.constant 0 : i32
    return %c0_i32, %c0_i32_0 : i32, i32
  }
  func.func @transform_3(%arg0: i32) -> (i32, i32) {
    %c0_i32 = arith.constant 0 : i32
    %c0_i32_0 = arith.constant 0 : i32
    %c0_i32_1 = arith.constant 0 : i32
    return %c0_i32, %c0_i32_0 : i32, i32
  }
  func.func @transform_4(%arg0: i32) -> (i32, i32) {
    %c0_i32 = arith.constant 0 : i32
    %c0_i32_0 = arith.constant 0 : i32
    %c0_i32_1 = arith.constant 0 : i32
    return %c0_i32, %c0_i32_0 : i32, i32
  }
  func.func @transform_5(%arg0: i32) -> (i32, i32) {
    %c0_i32 = arith.constant 0 : i32
    %c0_i32_0 = arith.constant 0 : i32
    %c0_i32_1 = arith.constant 0 : i32
    return %c0_i32, %c0_i32_0 : i32, i32
  }
  func.func @transform_6(%arg0: i32) -> (i32, i32) {
    %c0_i32 = arith.constant 0 : i32
    %c0_i32_0 = arith.constant 0 : i32
    return %c0_i32, %arg0 : i32, i32
  }
}

</mosaic_0001>

<llo_original>
// kernel: _lambda_.1
$region0: #{_lambda_.1}
  #allocation0 [shape = 'u32[]', space=smem, size = 0x4, offset = 0x4, fixed_abs, tag = 'smem constant byte address 0x4 - core index']
  #allocation1 [shape = 'u32[72,128]{1,0:T(1,128)}', space=vmem, size = 0x9000, scoped, tag = 'internal scratch']
  %s0 = inlined_call_operand.vmem [shape: f32[1,512], index: 0, kind: input, shape index: {}]
  %s1 = inlined_call_operand.vmem [shape: f32[9,256], index: 1, kind: input, shape index: {}]
  %s2 = inlined_call_operand.vmem [shape: f32[8,10], index: 2, kind: input, shape index: {}]
  %s3 = inlined_call_operand.vmem [shape: f32[8,73], index: 3, kind: input, shape index: {}]
  %s4 = inlined_call_operand.vmem [shape: f32[2,73], index: 4, kind: input, shape index: {}]
  %s5 = inlined_call_operand.vmem [shape: f32[8,4], index: 5, kind: input, shape index: {}]
  %s6 = inlined_call_operand.vmem [shape: f32[2,512], index: 6, kind: output, shape index: {}]
  %s7 = sld [smem:[#allocation0]]
  $region57: #{_lambda_.1} parent=0
    _
  %s9 = ssub.s32 1, %s7
  %s10 = scalar_select 0, %s9, %s7
  loop: start=0, step=1, limit=4
  $region2: #{_lambda_.1} parent=0 // loop_pre_header
    _
  $region3: #{_lambda_.1} parent=0 // loop_header
    %s12 = sphi 0, %s16
    %p13 = scmp.ge.s32.totalorder %s12, 4
    %s22 = sphi 0, %s24
    %s25 = sphi 0, %s22
    %s26 = sphi 0, %s25
    %s42 = sphi 0, %s26
    %s46 = sphi 0, %s46
    %s48 = sphi 0, %s46
    %s49 = sphi 0, %s48
    %s63 = sphi 0, %s49
    %s67 = sphi 0, %s67
    %s69 = sphi 0, %s67
    %s70 = sphi 0, %s69
    %s84 = sphi 0, %s70
    %s88 = sphi 0, %s88
    %s90 = sphi 0, %s88
    %s91 = sphi 0, %s90
    %s105 = sphi 0, %s91
    %s109 = sphi 0, %s109
    %s111 = sphi 0, %s109
    %s112 = sphi 0, %s111
    %s126 = sphi 0, %s112
    %s130 = sphi 0, %s130
    %s132 = sphi 0, %s130
    %s133 = sphi 0, %s132
    %s147 = sphi 0, %s133
    %s153 = sphi 0, %s155
    %s156 = sphi 0, %s153
    %s157 = sphi 0, %s156
    %s173 = sphi 0, %s157
  $region4: #{_lambda_.1} parent=0 // loop_header_branch
    %15 = sbr.rel (%p13) target = $region8
  $region5: #{_lambda_.1} parent=0 // loop_body
    %s17 = ssub.s32 %s12, 1
    %s18 = ssub.s32 %s12, 2
    %s19 = sadd.s32 %s12, 1
    %s20 = ssub.s32 %s12, %s19
    %p21 = scmp.eq.s32.totalorder %s20, 0
    %s23 = sadd.s32 %s22, 1
    %s24 = scalar_select %p21, %s22, %s23
    %p27 = pneg %p21
    %p28 = scmp.eq.s32.totalorder %s12, 1
    %p29 = por %p27, %p28
    %p30 = scmp.ne.s32.totalorder %s22, %s25
    %p31 = scmp.eq.s32.totalorder %s12, 0
    %p32 = por %p30, %p31
    %p33 = scmp.ne.s32.totalorder %s22, %s25
    %p34 = scmp.eq.s32.totalorder %s17, 1
    %p35 = por %p33, %p34
    %p36 = scmp.ne.s32.totalorder %s25, %s26
    %p37 = scmp.eq.s32.totalorder %s17, 0
    %p38 = por %p36, %p37
    %p39 = scmp.ne.s32.totalorder %s25, %s26
    %p40 = scmp.eq.s32.totalorder %s18, 1
    %p41 = por %p39, %p40
    %p43 = scmp.ne.s32.totalorder %s26, %s42
    %p44 = scmp.eq.s32.totalorder %s18, 0
    %p45 = por %p43, %p44
    %s47 = sadd.s32 %s46, 1
    %p50 = scmp.eq.s32.totalorder %s12, 1
    %p51 = scmp.ne.s32.totalorder %s46, %s48
    %p52 = scmp.eq.s32.totalorder %s12, 0
    %p53 = por %p51, %p52
    %p54 = scmp.ne.s32.totalorder %s46, %s48
    %p55 = scmp.eq.s32.totalorder %s17, 1
    %p56 = por %p54, %p55
    %p57 = scmp.ne.s32.totalorder %s48, %s49
    %p58 = scmp.eq.s32.totalorder %s17, 0
    %p59 = por %p57, %p58
    %p60 = scmp.ne.s32.totalorder %s48, %s49
    %p61 = scmp.eq.s32.totalorder %s18, 1
    %p62 = por %p60, %p61
    %p64 = scmp.ne.s32.totalorder %s49, %s63
    %p65 = scmp.eq.s32.totalorder %s18, 0
    %p66 = por %p64, %p65
    %s68 = sadd.s32 %s67, 1
    %p71 = scmp.eq.s32.totalorder %s12, 1
    %p72 = scmp.ne.s32.totalorder %s67, %s69
    %p73 = scmp.eq.s32.totalorder %s12, 0
    %p74 = por %p72, %p73
    %p75 = scmp.ne.s32.totalorder %s67, %s69
    %p76 = scmp.eq.s32.totalorder %s17, 1
    %p77 = por %p75, %p76
    %p78 = scmp.ne.s32.totalorder %s69, %s70
    %p79 = scmp.eq.s32.totalorder %s17, 0
    %p80 = por %p78, %p79
    %p81 = scmp.ne.s32.totalorder %s69, %s70
    %p82 = scmp.eq.s32.totalorder %s18, 1
    %p83 = por %p81, %p82
    %p85 = scmp.ne.s32.totalorder %s70, %s84
    %p86 = scmp.eq.s32.totalorder %s18, 0
    %p87 = por %p85, %p86
    %s89 = sadd.s32 %s88, 1
    %p92 = scmp.eq.s32.totalorder %s12, 1
    %p93 = scmp.ne.s32.totalorder %s88, %s90
    %p94 = scmp.eq.s32.totalorder %s12, 0
    %p95 = por %p93, %p94
    %p96 = scmp.ne.s32.totalorder %s88, %s90
    %p97 = scmp.eq.s32.totalorder %s17, 1
    %p98 = por %p96, %p97
    %p99 = scmp.ne.s32.totalorder %s90, %s91
    %p100 = scmp.eq.s32.totalorder %s17, 0
    %p101 = por %p99, %p100
    %p102 = scmp.ne.s32.totalorder %s90, %s91
    %p103 = scmp.eq.s32.totalorder %s18, 1
    %p104 = por %p102, %p103
    %p106 = scmp.ne.s32.totalorder %s91, %s105
    %p107 = scmp.eq.s32.totalorder %s18, 0
    %p108 = por %p106, %p107
    %s110 = sadd.s32 %s109, 1
    %p113 = scmp.eq.s32.totalorder %s12, 1
    %p114 = scmp.ne.s32.totalorder %s109, %s111
    %p115 = scmp.eq.s32.totalorder %s12, 0
    %p116 = por %p114, %p115
    %p117 = scmp.ne.s32.totalorder %s109, %s111
    %p118 = scmp.eq.s32.totalorder %s17, 1
    %p119 = por %p117, %p118
    %p120 = scmp.ne.s32.totalorder %s111, %s112
    %p121 = scmp.eq.s32.totalorder %s17, 0
    %p122 = por %p120, %p121
    %p123 = scmp.ne.s32.totalorder %s111, %s112
    %p124 = scmp.eq.s32.totalorder %s18, 1
    %p125 = por %p123, %p124
    %p127 = scmp.ne.s32.totalorder %s112, %s126
    %p128 = scmp.eq.s32.totalorder %s18, 0
    %p129 = por %p127, %p128
    %s131 = sadd.s32 %s130, 1
    %p134 = scmp.eq.s32.totalorder %s12, 1
    %p135 = scmp.ne.s32.totalorder %s130, %s132
    %p136 = scmp.eq.s32.totalorder %s12, 0
    %p137 = por %p135, %p136
    %p138 = scmp.ne.s32.totalorder %s130, %s132
    %p139 = scmp.eq.s32.totalorder %s17, 1
    %p140 = por %p138, %p139
    %p141 = scmp.ne.s32.totalorder %s132, %s133
    %p142 = scmp.eq.s32.totalorder %s17, 0
    %p143 = por %p141, %p142
    %p144 = scmp.ne.s32.totalorder %s132, %s133
    %p145 = scmp.eq.s32.totalorder %s18, 1
    %p146 = por %p144, %p145
    %p148 = scmp.ne.s32.totalorder %s133, %s147
    %p149 = scmp.eq.s32.totalorder %s18, 0
    %p150 = por %p148, %p149
    %s151 = ssub.s32 %s12, %s19
    %p152 = scmp.eq.s32.totalorder %s151, 0
    %s154 = sadd.s32 %s153, 1
    %s155 = scalar_select %p152, %s153, %s154
    %p158 = pneg %p152
    %p159 = scmp.eq.s32.totalorder %s12, 1
    %p160 = por %p158, %p159
    %p161 = scmp.ne.s32.totalorder %s153, %s156
    %p162 = scmp.eq.s32.totalorder %s12, 0
    %p163 = por %p161, %p162
    %p164 = scmp.ne.s32.totalorder %s153, %s156
    %p165 = scmp.eq.s32.totalorder %s17, 1
    %p166 = por %p164, %p165
    %p167 = scmp.ne.s32.totalorder %s156, %s157
    %p168 = scmp.eq.s32.totalorder %s17, 0
    %p169 = por %p167, %p168
    %p170 = scmp.ne.s32.totalorder %s156, %s157
    %p171 = scmp.eq.s32.totalorder %s18, 1
    %p172 = por %p170, %p171
    %p174 = scmp.ne.s32.totalorder %s157, %s173
    %p175 = scmp.eq.s32.totalorder %s18, 0
    %p176 = por %p174, %p175
    %p177 = scmp.le.s32.totalorder 1, %s12
    %p178 = scmp.lt.s32.totalorder %s12, 3
    %p179 = pnand %p177, %p178
    %p180 = pneg %p179
    // Predicated region
    $region9: #{_lambda_.1} parent=5 // pred_check
      _
    $region10: #{_lambda_.1} parent=5 // pred_check_branch
      %182 = sbr.rel (%p179) target = $region12
    $region11: #{_lambda_.1} parent=5 // pred_region
      %s183 = ssub.s32 %s12, 1
      // Predicated region
      $region13: #{_lambda_.1} parent=11 // pred_check
        %p184 = pneg %p59
      $region14: #{_lambda_.1} parent=11 // pred_check_branch
        %186 = sbr.rel (%p184) target = $region16
      $region15: #{_lambda_.1} parent=11 // pred_region
        _
      $region16: #{_lambda_.1} parent=11 // pred_fallthru
        _
      // Predicated region
      $region17: #{_lambda_.1} parent=11 // pred_check
        %p187 = pneg %p80
      $region18: #{_lambda_.1} parent=11 // pred_check_branch
        %189 = sbr.rel (%p187) target = $region20
      $region19: #{_lambda_.1} parent=11 // pred_region
        _
      $region20: #{_lambda_.1} parent=11 // pred_fallthru
        _
      // Predicated region
      $region21: #{_lambda_.1} parent=11 // pred_check
        %p190 = pneg %p101
      $region22: #{_lambda_.1} parent=11 // pred_check_branch
        %192 = sbr.rel (%p190) target = $region24
      $region23: #{_lambda_.1} parent=11 // pred_region
        _
      $region24: #{_lambda_.1} parent=11 // pred_fallthru
        _
      // Predicated region
      $region25: #{_lambda_.1} parent=11 // pred_check
        %p193 = pneg %p122
      $region26: #{_lambda_.1} parent=11 // pred_check_branch
        %195 = sbr.rel (%p193) target = $region28
      $region27: #{_lambda_.1} parent=11 // pred_region
        _
      $region28: #{_lambda_.1} parent=11 // pred_fallthru
        _
      // Predicated region
      $region29: #{_lambda_.1} parent=11 // pred_check
        %p196 = pneg %p143
      $region30: #{_lambda_.1} parent=11 // pred_check_branch
        %198 = sbr.rel (%p196) target = $region32
      $region31: #{_lambda_.1} parent=11 // pred_region
        _
      $region32: #{_lambda_.1} parent=11 // pred_fallthru
        _
    $region12: #{_lambda_.1} parent=5 // pred_fallthru
      _
    %p199 = scmp.lt.s32.totalorder %s12, 2
    // Predicated region
    $region33: #{_lambda_.1} parent=5 // pred_check
      %p200 = pneg %p199
    $region34: #{_lambda_.1} parent=5 // pred_check_branch
      %202 = sbr.rel (%p200) target = $region36
    $region35: #{_lambda_.1} parent=5 // pred_region
      // Predicated region
      $region37: #{_lambda_.1} parent=35 // pred_check
        %p203 = pneg %p32
      $region38: #{_lambda_.1} parent=35 // pred_check_branch
        %205 = sbr.rel (%p203) target = $region40
      $region39: #{_lambda_.1} parent=35 // pred_region
        %s206 = smul.u32 2, %s12
        %p207 = scmp.lt.s32.totalorder %s206, 3
        %s208 = scalar_select %p207, %s206, 3
        %s209 = scalar_lea.vmem %s0, %s208
        %s210 = smul.u32 2, %s12
      $region40: #{_lambda_.1} parent=35 // pred_fallthru
        _
    $region36: #{_lambda_.1} parent=5 // pred_fallthru
      _
    %p211 = scmp.le.s32.totalorder 1, %s12
    %p212 = scmp.lt.s32.totalorder %s12, 3
    %p213 = pnand %p211, %p212
    %p214 = pneg %p213
    // Predicated region
    $region41: #{_lambda_.1} parent=5 // pred_check
      _
    $region42: #{_lambda_.1} parent=5 // pred_check_branch
      %216 = sbr.rel (%p213) target = $region44
    $region43: #{_lambda_.1} parent=5 // pred_region
      %s217 = ssub.s32 %s12, 1
      %s218 = smul.u32 2, %s17
      %p219 = scmp.lt.s32.totalorder %s218, 3
      %s220 = scalar_select %p219, %s218, 3
      %s221 = scalar_lea.vmem %s0, %s220
      %p222 = pneg %p38
      %p223 = pneg %p35
      %p224 = pneg %p59
      %p225 = pneg %p56
      %p226 = pneg %p80
      %p227 = pneg %p77
      %p228 = pneg %p101
      %p229 = pneg %p98
      %p230 = pneg %p122
      %p231 = pneg %p119
      %p232 = pneg %p143
      %p233 = pneg %p140
      %p234 = pneg %p169
      %p235 = pneg %p166
      %s236 = smul.u32 2, %s17
      %p237 = scmp.lt.s32.totalorder %s236, 3
      %s238 = scalar_select %p237, %s236, 3
      %s239 = smul.addr %s238, 2
      %s240 = scalar_lea.vmem %s6, %s239
      %s241 = smul.u32 2, %s17
      %p242 = scmp.lt.s32.totalorder %s241, 3
      %s243 = scalar_select %p242, %s241, 3
      %s244 = scalar_lea.vmem %s0, %s243
      %s245 = smul.u32 2, %s17
      %s246 = smul.u32 2, %s17
      %p247 = scmp.lt.s32.totalorder %s246, 3
      %s248 = scalar_select %p247, %s246, 3
      %s249 = smul.addr %s248, 2
      %s250 = scalar_lea.vmem %s6, %s249
      %s251 = smul.u32 2, %s17
      %v252 = vld [vmem:[%s1] sm:$0xff]
      %v253 = vld [vmem:[%s1 + $0x8] sm:$0xff]
      %v254 = vld [vmem:[%s1 + $0x10] sm:$0x1]
      %v255 = vld [vmem:[%s1 + $0x18] sm:$0x1]
      %v256 = vld [vmem:[%s5] sm:$0xff]
      %v257 = vld [vmem:[%s244] sm:$0x3]
      %v259 = vperm.slane %v257, 0
      %v260 = vperm.slane %v257, 1
      %263 = vrot.lane.b32.xlu0 %v259, 17
      %v264 = vpop.permute.xlu0 %263
      %265 = vrot.lane.b32.xlu0 %v260, 17
      %v266 = vpop.permute.xlu0 %265
      %v267 = vlaneseq
      %v268 = vand.u32 %v267, 127
      %vm269 = vcmp.lt.s32.totalorder %v268, 17
      %v270 = vsel %vm269, %v264, %v266
      %v271 = vsel %vm269, %v266, %v264
      %v272 = vmul.f32 %v271, %v252
      %v273 = vmul.f32 %v270, %v253
      %274 = vrot.lane.b32.xlu0 %v259, 16
      %v275 = vpop.permute.xlu0 %274
      %276 = vrot.lane.b32.xlu0 %v260, 16
      %v277 = vpop.permute.xlu0 %276
      %vm278 = vcmp.lt.s32.totalorder %v268, 16
      %v279 = vsel %vm278, %v275, %v277
      %v280 = vsel %vm278, %v277, %v275
      %v283 = vrot.slane %v252, 1
      %v284 = vrot.slane %v253, 1
      %v287 = vmul.f32 %v280, %v283
      %v288 = vmul.f32 %v279, %v284
      %289 = vrot.lane.b32.xlu0 %v259, 15
      %v290 = vpop.permute.xlu0 %289
      %291 = vrot.lane.b32.xlu0 %v260, 15
      %v292 = vpop.permute.xlu0 %291
      %vm293 = vcmp.lt.s32.totalorder %v268, 15
      %v294 = vsel %vm293, %v290, %v292
      %v295 = vsel %vm293, %v292, %v290
      %v296 = vrot.slane %v252, 2
      %v297 = vrot.slane %v253, 2
      %v300 = vmul.f32 %v295, %v296
      %v301 = vmul.f32 %v294, %v297
      %302 = vrot.lane.b32.xlu0 %v259, 1
      %v303 = vpop.permute.xlu0 %302
      %304 = vrot.lane.b32.xlu0 %v260, 1
      %v305 = vpop.permute.xlu0 %304
      %vm306 = vcmp.lt.s32.totalorder %v268, 1
      %v307 = vsel %vm306, %v303, %v305
      %v308 = vsel %vm306, %v305, %v303
      %v309 = vrot.slane %v252, 3
      %v310 = vrot.slane %v253, 3
      %v313 = vmul.f32 %v308, %v309
      %v314 = vmul.f32 %v307, %v310
      %315 = vrot.lane.b32.xlu0 %v259, 127
      %v316 = vpop.permute.xlu0 %315
      %317 = vrot.lane.b32.xlu0 %v260, 127
      %v318 = vpop.permute.xlu0 %317
      %vm319 = vcmp.lt.s32.totalorder %v268, 127
      %v320 = vsel %vm319, %v316, %v318
      %v321 = vsel %vm319, %v318, %v316
      %v322 = vrot.slane %v252, 5
      %v323 = vrot.slane %v253, 5
      %v326 = vmul.f32 %v320, %v322
      %v327 = vmul.f32 %v321, %v323
      %328 = vrot.lane.b32.xlu0 %v259, 113
      %v329 = vpop.permute.xlu0 %328
      %330 = vrot.lane.b32.xlu0 %v260, 113
      %v331 = vpop.permute.xlu0 %330
      %vm332 = vcmp.lt.s32.totalorder %v268, 113
      %v333 = vsel %vm332, %v329, %v331
      %v334 = vsel %vm332, %v331, %v329
      %v335 = vrot.slane %v252, 6
      %v336 = vrot.slane %v253, 6
      %v339 = vmul.f32 %v333, %v335
      %v340 = vmul.f32 %v334, %v336
      %341 = vrot.lane.b32.xlu0 %v259, 112
      %v342 = vpop.permute.xlu0 %341
      %343 = vrot.lane.b32.xlu0 %v260, 112
      %v344 = vpop.permute.xlu0 %343
      %vm345 = vcmp.lt.s32.totalorder %v268, 112
      %v346 = vsel %vm345, %v342, %v344
      %v347 = vsel %vm345, %v344, %v342
      %v348 = vrot.slane %v252, 7
      %v349 = vrot.slane %v253, 7
      %v352 = vmul.f32 %v346, %v348
      %v353 = vmul.f32 %v347, %v349
      %354 = vrot.lane.b32.xlu0 %v259, 111
      %v355 = vpop.permute.xlu0 %354
      %356 = vrot.lane.b32.xlu0 %v260, 111
      %v357 = vpop.permute.xlu0 %356
      %vm358 = vcmp.lt.s32.totalorder %v268, 111
      %v359 = vsel %vm358, %v355, %v357
      %v360 = vsel %vm358, %v357, %v355
      %v361 = vmul.f32 %v359, %v254
      %v362 = vmul.f32 %v360, %v255
      %v365 = vrot.slane %v287, 7
      %v366 = vrot.slane %v288, 7
      %v371 = vrot.slane %v300, 6
      %v372 = vrot.slane %v301, 6
      %v377 = vrot.slane %v313, 5
      %v378 = vrot.slane %v314, 5
      %v383 = vrot.slane %v326, 3
      %v384 = vrot.slane %v327, 3
      %v389 = vrot.slane %v339, 2
      %v390 = vrot.slane %v340, 2
      %v395 = vrot.slane %v352, 1
      %v396 = vrot.slane %v353, 1
      %vm399 = vcmask 1040384
      %v400 = vsel %vm399, %v272, %v365
      %v401 = vsel %vm399, %v273, %v366
      %vm402 = vcmask 1041408
      %v403 = vsel %vm402, %v400, %v371
      %v404 = vsel %vm402, %v401, %v372
      %vm405 = vcmask 1042432
      %v406 = vsel %vm405, %v403, %v377
      %v407 = vsel %vm405, %v404, %v378
      %vm408 = vcmask 1043456
      %v409 = vsel %vm408, %v406, %v259
      %v410 = vsel %vm408, %v407, %v260
      %vm411 = vcmask 1044480
      %v412 = vsel %vm411, %v409, %v383
      %v413 = vsel %vm411, %v410, %v384
      %vm414 = vcmask 1045504
      %v415 = vsel %vm414, %v412, %v389
      %v416 = vsel %vm414, %v413, %v390
      %vm417 = vcmask 1046528
      %v418 = vsel %vm417, %v415, %v395
      %v419 = vsel %vm417, %v416, %v396
      %v420 = vsel %vm399, %v361, %v309
      %v421 = vsel %vm399, %v362, %v310
      %v422 = vld [vmem:[%s2] sm:$0xff]
      %vm423 = vcmask 80896
      %v425 = vsel %vm423, %v422, 0
      %v428 = vsel %vm402, %v420, 0
      %v431 = vsel %vm402, %v421, 0
      %433 = vmatpush.msra.mxu0 0.0
      %434 = vmatpush.msra.mxu0 0.0
      %435 = vmatpush.msra.mxu0 0.0
      %436 = vmatpush.msra.mxu0 0.0
      %437 = vmatpush.msra.mxu0 0.0
      %438 = vmatpush.msra.mxu0 0.0
      %439 = vmatpush.msra.mxu0 0.0
      %440 = vmatpush.msra.mxu0 0.0
      %441 = vmatpush.msra.mxu0 0.0
      %442 = vmatpush.msra.mxu0 0.0
      %443 = vmatpush.msra.mxu0 0.0
      %444 = vmatpush.msra.mxu0 0.0
      %445 = vmatpush.msra.mxu0 0.0
      %446 = vmatpush.msra.mxu0 0.0
      %447 = vmatpush.msra.mxu0 %v428
      %448 = vmatpush.msra.mxu0 %v418
      %449 = vmatmul.f32.gmra.mxu0 %v425
      %v450 = vpop.f32.mrf.mxu0
      %v451 = vadd.f32 0.0, %v450
      %452 = vdwg.mxu0
      %453 = vmatpush.msra.mxu0 0.0
      %454 = vmatpush.msra.mxu0 0.0
      %455 = vmatpush.msra.mxu0 0.0
      %456 = vmatpush.msra.mxu0 0.0
      %457 = vmatpush.msra.mxu0 0.0
      %458 = vmatpush.msra.mxu0 0.0
      %459 = vmatpush.msra.mxu0 0.0
      %460 = vmatpush.msra.mxu0 0.0
      %461 = vmatpush.msra.mxu0 0.0
      %462 = vmatpush.msra.mxu0 0.0
      %463 = vmatpush.msra.mxu0 0.0
      %464 = vmatpush.msra.mxu0 0.0
      %465 = vmatpush.msra.mxu0 0.0
      %466 = vmatpush.msra.mxu0 0.0
      %467 = vmatpush.msra.mxu0 %v431
      %468 = vmatpush.msra.mxu0 %v419
      %469 = vmatmul.f32.gmra.mxu0 %v425
      %v470 = vpop.f32.mrf.mxu0
      %v471 = vadd.f32 0.0, %v470
      %472 = vdwg.mxu0
      %vm473 = vcmp.gt.f32.partialorder %v451, 20.0
      %vm474 = vcmp.gt.f32.partialorder %v471, 20.0
      %v475 = vmin.f32 %v451, 20.0
      %v476 = vmin.f32 %v471, 20.0
      %v477 = vmul.f32 %v475, 1.442695
      %v478 = vpow.pop %v477
      %v479 = vmul.f32 %v476, 1.442695
      %v480 = vpow.pop %v479
      %v481 = vadd.f32 %v478, 1.0
      %v482 = vlog2.pop %v481
      %v483 = vmul.f32 %v482, 0.6931472
      %v484 = vmul.f32 -0.5, %v478
      %v485 = vadd.f32 %v484, 1.0
      %v486 = vmul.f32 %v485, %v478
      %v487 = vand.u32 2147483647, %v478
      %vm488 = vcmp.lt.f32.partialorder %v487, 0.0004427343
      %v489 = vsel %vm488, %v486, %v483
      %v490 = vadd.f32 %v480, 1.0
      %v491 = vlog2.pop %v490
      %v492 = vmul.f32 %v491, 0.6931472
      %v493 = vmul.f32 -0.5, %v480
      %v494 = vadd.f32 %v493, 1.0
      %v495 = vmul.f32 %v494, %v480
      %v496 = vand.u32 2147483647, %v480
      %vm497 = vcmp.lt.f32.partialorder %v496, 0.0004427343
      %v498 = vsel %vm497, %v495, %v492
      %v499 = vsel %vm473, %v451, %v489
      %v500 = vsel %vm474, %v471, %v498
      %502 = vset.pattern.permute.xlu0 0
      %503 = vperm.xlu0 %502, %v256
      %v504 = vpop.permute.xlu0 %503
      %v506 = vmul.f32 %v499, %v504
      %v507 = vmul.f32 %v500, %v504
      %508 = vset.pattern.permute.xlu0 1
      %509 = vperm.xlu0 %508, %v256
      %v510 = vpop.permute.xlu0 %509
      %v512 = vadd.f32 %v506, %v510
      %v513 = vadd.f32 %v507, %v510
      %514 = vrot.lane.b32.xlu0 %v512, 17
      %v515 = vpop.permute.xlu0 %514
      %516 = vrot.lane.b32.xlu0 %v513, 17
      %v517 = vpop.permute.xlu0 %516
      %v518 = vsel %vm269, %v515, %v517
      %v519 = vsel %vm269, %v517, %v515
      %v520 = vperm.slane %v252, 0
      %v521 = vperm.slane %v253, 0
      %v522 = vmul.f32 %v519, %v520
      %v523 = vmul.f32 %v518, %v521
      %524 = vrot.lane.b32.xlu0 %v512, 16
      %v525 = vpop.permute.xlu0 %524
      %526 = vrot.lane.b32.xlu0 %v513, 16
      %v527 = vpop.permute.xlu0 %526
      %v528 = vsel %vm278, %v525, %v527
      %v529 = vsel %vm278, %v527, %v525
      %v530 = vperm.slane %v252, 1
      %v531 = vperm.slane %v253, 1
      %v532 = vmul.f32 %v529, %v530
      %v533 = vmul.f32 %v528, %v531
      %534 = vrot.lane.b32.xlu0 %v512, 15
      %v535 = vpop.permute.xlu0 %534
      %536 = vrot.lane.b32.xlu0 %v513, 15
      %v537 = vpop.permute.xlu0 %536
      %v538 = vsel %vm293, %v535, %v537
      %v539 = vsel %vm293, %v537, %v535
      %v540 = vperm.slane %v252, 2
      %v541 = vperm.slane %v253, 2
      %v542 = vmul.f32 %v539, %v540
      %v543 = vmul.f32 %v538, %v541
      %544 = vrot.lane.b32.xlu0 %v512, 1
      %v545 = vpop.permute.xlu0 %544
      %546 = vrot.lane.b32.xlu0 %v513, 1
      %v547 = vpop.permute.xlu0 %546
      %v548 = vsel %vm306, %v545, %v547
      %v549 = vsel %vm306, %v547, %v545
      %v550 = vperm.slane %v252, 3
      %v551 = vperm.slane %v253, 3
      %v552 = vmul.f32 %v549, %v550
      %v553 = vmul.f32 %v548, %v551
      %554 = vrot.lane.b32.xlu0 %v512, 127
      %v555 = vpop.permute.xlu0 %554
      %556 = vrot.lane.b32.xlu0 %v513, 127
      %v557 = vpop.permute.xlu0 %556
      %v558 = vsel %vm319, %v555, %v557
      %v559 = vsel %vm319, %v557, %v555
      %v560 = vperm.slane %v252, 5
      %v561 = vperm.slane %v253, 5
      %v562 = vmul.f32 %v558, %v560
      %v563 = vmul.f32 %v559, %v561
      %564 = vrot.lane.b32.xlu0 %v512, 113
      %v565 = vpop.permute.xlu0 %564
      %566 = vrot.lane.b32.xlu0 %v513, 113
      %v567 = vpop.permute.xlu0 %566
      %v568 = vsel %vm332, %v565, %v567
      %v569 = vsel %vm332, %v567, %v565
      %v570 = vperm.slane %v252, 6
      %v571 = vperm.slane %v253, 6
      %v572 = vmul.f32 %v568, %v570
      %v573 = vmul.f32 %v569, %v571
      %574 = vrot.lane.b32.xlu0 %v512, 112
      %v575 = vpop.permute.xlu0 %574
      %576 = vrot.lane.b32.xlu0 %v513, 112
      %v577 = vpop.permute.xlu0 %576
      %v578 = vsel %vm345, %v575, %v577
      %v579 = vsel %vm345, %v577, %v575
      %v580 = vperm.slane %v252, 7
      %v581 = vperm.slane %v253, 7
      %v582 = vmul.f32 %v578, %v580
      %v583 = vmul.f32 %v579, %v581
      %584 = vrot.lane.b32.xlu0 %v512, 111
      %v585 = vpop.permute.xlu0 %584
      %586 = vrot.lane.b32.xlu0 %v513, 111
      %v587 = vpop.permute.xlu0 %586
      %v588 = vsel %vm358, %v585, %v587
      %v589 = vsel %vm358, %v587, %v585
      %v590 = vperm.slane %v254, 0
      %v591 = vperm.slane %v255, 0
      %v592 = vmul.f32 %v588, %v590
      %v593 = vmul.f32 %v589, %v591
      %v594 = vrot.slane %v252, 4
      %v595 = vrot.slane %v253, 4
      %v596 = vld [vmem:[%s3] sm:$0xff]
      %vm597 = vcmask 596992
      %v599 = vsel %vm597, %v596, 0
      %v601 = vsel %vm399, %v594, 0
      %v603 = vsel %vm399, %v595, 0
      %605 = vmatpush.msra.mxu0 0.0
      %606 = vmatpush.msra.mxu0 0.0
      %607 = vmatpush.msra.mxu0 0.0
      %608 = vmatpush.msra.mxu0 0.0
      %609 = vmatpush.msra.mxu0 0.0
      %610 = vmatpush.msra.mxu0 0.0
      %611 = vmatpush.msra.mxu0 %v601
      %612 = vmatpush.msra.mxu0 %v592
      %613 = vmatpush.msra.mxu0 %v582
      %614 = vmatpush.msra.mxu0 %v572
      %615 = vmatpush.msra.mxu0 %v562
      %616 = vmatpush.msra.mxu0 %v512
      %617 = vmatpush.msra.mxu0 %v552
      %618 = vmatpush.msra.mxu0 %v542
      %619 = vmatpush.msra.mxu0 %v532
      %620 = vmatpush.msra.mxu0 %v522
      %621 = vmatmul.f32.gmra.mxu0 %v599
      %v622 = vpop.f32.mrf.mxu0
      %v623 = vadd.f32 0.0, %v622
      %624 = vdwg.mxu0
      %625 = vmatpush.msra.mxu0 0.0
      %626 = vmatpush.msra.mxu0 0.0
      %627 = vmatpush.msra.mxu0 0.0
      %628 = vmatpush.msra.mxu0 0.0
      %629 = vmatpush.msra.mxu0 0.0
      %630 = vmatpush.msra.mxu0 0.0
      %631 = vmatpush.msra.mxu0 %v603
      %632 = vmatpush.msra.mxu0 %v593
      %633 = vmatpush.msra.mxu0 %v583
      %634 = vmatpush.msra.mxu0 %v573
      %635 = vmatpush.msra.mxu0 %v563
      %636 = vmatpush.msra.mxu0 %v513
      %637 = vmatpush.msra.mxu0 %v553
      %638 = vmatpush.msra.mxu0 %v543
      %639 = vmatpush.msra.mxu0 %v533
      %640 = vmatpush.msra.mxu0 %v523
      %641 = vmatmul.f32.gmra.mxu0 %v599
      %v642 = vpop.f32.mrf.mxu0
      %v643 = vadd.f32 0.0, %v642
      %644 = vdwg.mxu0
      %vm645 = vcmp.gt.f32.partialorder %v623, 20.0
      %vm646 = vcmp.gt.f32.partialorder %v643, 20.0
      %v647 = vmin.f32 %v623, 20.0
      %v648 = vmin.f32 %v643, 20.0
      %v649 = vmul.f32 %v647, 1.442695
      %v650 = vpow.pop %v649
      %v651 = vmul.f32 %v648, 1.442695
      %v652 = vpow.pop %v651
      %v653 = vadd.f32 %v650, 1.0
      %v654 = vlog2.pop %v653
      %v655 = vmul.f32 %v654, 0.6931472
      %v656 = vmul.f32 -0.5, %v650
      %v657 = vadd.f32 %v656, 1.0
      %v658 = vmul.f32 %v657, %v650
      %v659 = vand.u32 2147483647, %v650
      %vm660 = vcmp.lt.f32.partialorder %v659, 0.0004427343
      %v661 = vsel %vm660, %v658, %v655
      %v662 = vadd.f32 %v652, 1.0
      %v663 = vlog2.pop %v662
      %v664 = vmul.f32 %v663, 0.6931472
      %v665 = vmul.f32 -0.5, %v652
      %v666 = vadd.f32 %v665, 1.0
      %v667 = vmul.f32 %v666, %v652
      %v668 = vand.u32 2147483647, %v652
      %vm669 = vcmp.lt.f32.partialorder %v668, 0.0004427343
      %v670 = vsel %vm669, %v667, %v664
      %v671 = vsel %vm645, %v623, %v661
      %v672 = vsel %vm646, %v643, %v670
      %673 = vset.pattern.permute.xlu0 2
      %674 = vperm.xlu0 %673, %v256
      %v675 = vpop.permute.xlu0 %674
      %v677 = vmul.f32 %v671, %v675
      %v678 = vmul.f32 %v672, %v675
      %679 = vset.pattern.permute.xlu0 3
      %680 = vperm.xlu0 %679, %v256
      %v681 = vpop.permute.xlu0 %680
      %v683 = vadd.f32 %v677, %v681
      %v684 = vadd.f32 %v678, %v681
      %685 = vrot.lane.b32.xlu0 %v683, 17
      %v686 = vpop.permute.xlu0 %685
      %687 = vrot.lane.b32.xlu0 %v684, 17
      %v688 = vpop.permute.xlu0 %687
      %v689 = vsel %vm269, %v686, %v688
      %v690 = vsel %vm269, %v688, %v686
      %v691 = vmul.f32 %v690, %v520
      %v692 = vmul.f32 %v689, %v521
      %693 = vrot.lane.b32.xlu0 %v683, 16
      %v694 = vpop.permute.xlu0 %693
      %695 = vrot.lane.b32.xlu0 %v684, 16
      %v696 = vpop.permute.xlu0 %695
      %v697 = vsel %vm278, %v694, %v696
      %v698 = vsel %vm278, %v696, %v694
      %v699 = vmul.f32 %v698, %v530
      %v700 = vmul.f32 %v697, %v531
      %701 = vrot.lane.b32.xlu0 %v683, 15
      %v702 = vpop.permute.xlu0 %701
      %703 = vrot.lane.b32.xlu0 %v684, 15
      %v704 = vpop.permute.xlu0 %703
      %v705 = vsel %vm293, %v702, %v704
      %v706 = vsel %vm293, %v704, %v702
      %v707 = vmul.f32 %v706, %v540
      %v708 = vmul.f32 %v705, %v541
      %709 = vrot.lane.b32.xlu0 %v683, 1
      %v710 = vpop.permute.xlu0 %709
      %711 = vrot.lane.b32.xlu0 %v684, 1
      %v712 = vpop.permute.xlu0 %711
      %v713 = vsel %vm306, %v710, %v712
      %v714 = vsel %vm306, %v712, %v710
      %v715 = vmul.f32 %v714, %v550
      %v716 = vmul.f32 %v713, %v551
      %717 = vrot.lane.b32.xlu0 %v683, 127
      %v718 = vpop.permute.xlu0 %717
      %719 = vrot.lane.b32.xlu0 %v684, 127
      %v720 = vpop.permute.xlu0 %719
      %v721 = vsel %vm319, %v718, %v720
      %v722 = vsel %vm319, %v720, %v718
      %v723 = vmul.f32 %v721, %v560
      %v724 = vmul.f32 %v722, %v561
      %725 = vrot.lane.b32.xlu0 %v683, 113
      %v726 = vpop.permute.xlu0 %725
      %727 = vrot.lane.b32.xlu0 %v684, 113
      %v728 = vpop.permute.xlu0 %727
      %v729 = vsel %vm332, %v726, %v728
      %v730 = vsel %vm332, %v728, %v726
      %v731 = vmul.f32 %v729, %v570
      %v732 = vmul.f32 %v730, %v571
      %733 = vrot.lane.b32.xlu0 %v683, 112
      %v734 = vpop.permute.xlu0 %733
      %735 = vrot.lane.b32.xlu0 %v684, 112
      %v736 = vpop.permute.xlu0 %735
      %v737 = vsel %vm345, %v734, %v736
      %v738 = vsel %vm345, %v736, %v734
      %v739 = vmul.f32 %v737, %v580
      %v740 = vmul.f32 %v738, %v581
      %741 = vrot.lane.b32.xlu0 %v683, 111
      %v742 = vpop.permute.xlu0 %741
      %743 = vrot.lane.b32.xlu0 %v684, 111
      %v744 = vpop.permute.xlu0 %743
      %v745 = vsel %vm358, %v742, %v744
      %v746 = vsel %vm358, %v744, %v742
      %v747 = vmul.f32 %v745, %v590
      %v748 = vmul.f32 %v746, %v591
      %v749 = vld [vmem:[%s4] sm:$0x3]
      %v751 = vsel %vm597, %v749, 0
      %753 = vmatpush.msra.mxu0 0.0
      %754 = vmatpush.msra.mxu0 0.0
      %755 = vmatpush.msra.mxu0 0.0
      %756 = vmatpush.msra.mxu0 0.0
      %757 = vmatpush.msra.mxu0 0.0
      %758 = vmatpush.msra.mxu0 0.0
      %759 = vmatpush.msra.mxu0 %v601
      %760 = vmatpush.msra.mxu0 %v747
      %761 = vmatpush.msra.mxu0 %v739
      %762 = vmatpush.msra.mxu0 %v731
      %763 = vmatpush.msra.mxu0 %v723
      %764 = vmatpush.msra.mxu0 %v683
      %765 = vmatpush.msra.mxu0 %v715
      %766 = vmatpush.msra.mxu0 %v707
      %767 = vmatpush.msra.mxu0 %v699
      %768 = vmatpush.msra.mxu0 %v691
      %769 = vmatmul.f32.gmra.mxu0 %v751
      %v770 = vpop.f32.mrf.mxu0
      %v771 = vadd.f32 0.0, %v770
      %772 = vdwg.mxu0
      %773 = vmatpush.msra.mxu0 0.0
      %774 = vmatpush.msra.mxu0 0.0
      %775 = vmatpush.msra.mxu0 0.0
      %776 = vmatpush.msra.mxu0 0.0
      %777 = vmatpush.msra.mxu0 0.0
      %778 = vmatpush.msra.mxu0 0.0
      %779 = vmatpush.msra.mxu0 %v603
      %780 = vmatpush.msra.mxu0 %v748
      %781 = vmatpush.msra.mxu0 %v740
      %782 = vmatpush.msra.mxu0 %v732
      %783 = vmatpush.msra.mxu0 %v724
      %784 = vmatpush.msra.mxu0 %v684
      %785 = vmatpush.msra.mxu0 %v716
      %786 = vmatpush.msra.mxu0 %v708
      %787 = vmatpush.msra.mxu0 %v700
      %788 = vmatpush.msra.mxu0 %v692
      %789 = vmatmul.f32.gmra.mxu0 %v751
      %v790 = vpop.f32.mrf.mxu0
      %v791 = vadd.f32 0.0, %v790
      %792 = vdwg.mxu0
      %v795 = vrot.slane %v791, 6
      %v796 = vsel %vm402, %v771, %v795
      %798 = vst [vmem:[%s250] sm:$0xf] %v796
      %s799 = smul.u32 2, %s17
      %p800 = scmp.lt.s32.totalorder %s799, 3
      %s801 = scalar_select %p800, %s799, 3
      %s802 = smul.addr %s801, 2
      %s803 = scalar_lea.vmem %s6, %s802
      // Predicated region
      $region45: #{_lambda_.1} parent=43 // pred_check
        %p804 = pneg %p166
      $region46: #{_lambda_.1} parent=43 // pred_check_branch
        %806 = sbr.rel (%p804) target = $region48
      $region47: #{_lambda_.1} parent=43 // pred_region
        %s807 = smul.u32 2, %s17
      $region48: #{_lambda_.1} parent=43 // pred_fallthru
        _
    $region44: #{_lambda_.1} parent=5 // pred_fallthru
      _
    %p808 = scmp.le.s32.totalorder 2, %s12
    // Predicated region
    $region49: #{_lambda_.1} parent=5 // pred_check
      %p809 = pneg %p808
    $region50: #{_lambda_.1} parent=5 // pred_check_branch
      %811 = sbr.rel (%p809) target = $region52
    $region51: #{_lambda_.1} parent=5 // pred_region
      %s812 = ssub.s32 %s12, 2
      // Predicated region
      $region53: #{_lambda_.1} parent=51 // pred_check
        %p813 = pneg %p172
      $region54: #{_lambda_.1} parent=51 // pred_check_branch
        %815 = sbr.rel (%p813) target = $region56
      $region55: #{_lambda_.1} parent=51 // pred_region
        %s816 = smul.u32 2, %s18
        %p817 = scmp.lt.s32.totalorder %s816, 3
        %s818 = scalar_select %p817, %s816, 3
        %s819 = smul.addr %s818, 2
        %s820 = scalar_lea.vmem %s6, %s819
      $region56: #{_lambda_.1} parent=51 // pred_fallthru
        _
    $region52: #{_lambda_.1} parent=5 // pred_fallthru
      _
  $region6: #{_lambda_.1} parent=0 // loop_footer
    %s16 = sadd.s32 1, %s12
  $region7: #{_lambda_.1} parent=0 // loop_footer_branch
    %11 = sbr.rel target = $region3
  $region8: #{_lambda_.1} parent=0 // loop_exit
    _

</llo_original>
